<compile_context>
chip_gen: v5e
topology: v5e:2x2
jax: 0.10.0
libtpu: 0.0.40
codegen_flags: <defaults>
</compile_context>

<pallas_src>
import functools

import jax
import jax.numpy as jnp
from jax import lax
from jax.experimental import pallas as pl
from jax.experimental.pallas import tpu as pltpu


_VMEM_BUDGET_BYTES = 20 << 20   # accounted per-step working set target
_VMEM_LIMIT_BYTES = 32 << 20    # explicit scoped-VMEM limit (safe on v5e/v6e/v7x)


def _round_up(n, m):
    return -(-n // m) * m


def _vmem_bytes_per_step(blk, c_in, c_out, hw, hw_out, itemsize):
    """Double-buffer-aware per-grid-step VMEM footprint, padded to (8,128) tiles."""
    lane_in = _round_up(hw, 128)
    lane_out = _round_up(hw_out, 128)
    in_block = _round_up(blk * c_in, 8) * lane_in * itemsize
    out_block = blk * _round_up(c_out, 8) * lane_out * itemsize
    sel_block = _round_up(hw, 8) * lane_out * itemsize
    # f32 matmul result + its cast copy / zero pad bands (vregs / VMEM spill).
    inter = _round_up(blk * c_in, 8) * lane_out * (4 + itemsize)
    # Inputs/outputs are double-buffered by the pipeline.  sel's block index
    # never changes so it is DMA'd only once, but both buffers are allocated.
    return 2 * in_block + 2 * out_block + 2 * sel_block + inter


def _pick_batch_block(b, c_in, c_out, hw, hw_out, itemsize,
                      *, budget_bytes=_VMEM_BUDGET_BYTES, max_block=64):
    """Pick the per-grid-step batch block.

    Largest divisor of `b` whose double-buffered footprint fits `budget_bytes`,
    preferring (a) sublane-aligned input row counts (blk*C multiple of 8, or the
    full array) and (b) a grid of length >= 2 so the "parallel" grid axis can
    shard across v7x's two TensorCores.
    """
    def aligned(blk):
        # Output block minor dims always equal the full array dims, so only the
        # input block's second-minor dim (blk * c_in rows) constrains alignment.
        return (blk * c_in) % 8 == 0 or blk == b

    divisors = [d for d in range(1, min(b, max_block) + 1) if b % d == 0]
    candidates = [d for d in divisors if aligned(d)] or [b]
    fitting = [d for d in candidates
               if _vmem_bytes_per_step(d, c_in, c_out, hw, hw_out, itemsize)
               <= budget_bytes]
    if not fitting:
        return min(candidates)
    multi = [d for d in fitting if b // d >= 2]
    return max(multi) if multi else max(fitting)


def _shortcut_kernel(x_ref, sel_ref, o_ref, *, bblk, c_in, c_out, pad, precision):
    # x_ref:   (bblk * c_in, H*W)     lane-dense input rows (one per image-channel)
    # sel_ref: (H*W, Hh*Wh)           0/1 subsample-selection matrix (fetched once)
    # o_ref:   (bblk, c_out, Hh*Wh)   output block (whole images)
    hw_out = o_ref.shape[-1]

    # 2x2 spatial subsample of every (image, channel) row in one MXU matmul.
    # sel is 0/1 with exactly one nonzero per column, so this is pure data
    # movement; `precision` is chosen per dtype in the wrapper so it stays
    # bit-exact (HIGHEST for f32, single-pass DEFAULT for bf16/f16).
    ys = jnp.dot(
        x_ref[...],
        sel_ref[...],
        precision=precision,
        preferred_element_type=jnp.float32,
    ).astype(o_ref.dtype)                               # (bblk*c_in, Hh*Wh)
    y3 = ys.reshape(bblk, c_in, hw_out)                 # split leading dim only

    # Three block-wide stores (no per-image unrolled loop): zero the two channel
    # pad bands, then store all data channels of the whole block with a single
    # contiguous slice store.  For the real colornet shapes (c_in, pad multiples
    # of 8) every store is sublane-aligned and unmasked.
    if pad > 0:
        zpad = jnp.zeros((bblk, pad, hw_out), dtype=o_ref.dtype)
        o_ref[:, :pad, :] = zpad
        o_ref[:, pad + c_in:, :] = zpad
    o_ref[:, pad:pad + c_in, :] = y3


def lambda_layer(x, planes):
    """Pallas equivalent of
       lambda x: F.pad(x[:, :, ::2, ::2], (0,0,0,0, planes//4, planes//4), 'constant', 0)
    """
    b, c, h, w = x.shape
    assert h % 2 == 0 and w % 2 == 0, "spatial dims must be even for stride-2 subsampling"
    pad = planes // 4
    hh, wh = h // 2, w // 2
    c_out = c + 2 * pad
    hw, hw_out = h * w, hh * wh
    dtype = x.dtype

    # 0/1 selection matrix: sel[p, q] = 1 iff p == 2*(q//wh)*w + 2*(q%wh), so
    # column q of (x2d @ sel) picks pixel (2i, 2j) with q = i*wh + j.  Its block
    # index never changes, so the pipeline DMAs it exactly once.
    q = jnp.arange(hw_out, dtype=jnp.int32)
    src = 2 * (q // wh) * w + 2 * (q % wh)
    p = jnp.arange(hw, dtype=jnp.int32)
    sel = (p[:, None] == src[None, :]).astype(dtype)

    # Bit-exact MXU "copy": <=16-bit float activations need only a single pass
    # (products against exact 0/1 weights, accumulated in f32); f32 needs the
    # multi-pass HIGHEST decomposition to preserve the full mantissa.
    if jnp.issubdtype(dtype, jnp.floating) and jnp.dtype(dtype).itemsize <= 2:
        precision = lax.Precision.DEFAULT
    else:
        precision = lax.Precision.HIGHEST

    itemsize = jnp.dtype(dtype).itemsize
    bblk = _pick_batch_block(b, c, c_out, hw, hw_out, itemsize)
    grid = (b // bblk,)

    x2d = x.reshape(b * c, hw)                  # free reshape; lane-dense rows

    kernel = functools.partial(
        _shortcut_kernel, bblk=bblk, c_in=c, c_out=c_out, pad=pad,
        precision=precision)

    out3 = pl.pallas_call(
        kernel,
        out_shape=jax.ShapeDtypeStruct((b, c_out, hw_out), dtype),
        grid_spec=pltpu.PrefetchScalarGridSpec(
            num_scalar_prefetch=0,
            grid=grid,
            in_specs=[
                pl.BlockSpec((bblk * c, hw), lambda i: (i, 0)),
                pl.BlockSpec((hw, hw_out), lambda i: (0, 0)),   # constant block
            ],
            out_specs=pl.BlockSpec((bblk, c_out, hw_out), lambda i: (i, 0, 0)),
        ),
        compiler_params=pltpu.CompilerParams(
            dimension_semantics=("parallel",),
            vmem_limit_bytes=_VMEM_LIMIT_BYTES,
        ),
    )(x2d, sel)

    return out3.reshape(b, c_out, hh, wh)


if __name__ == "__main__":
    # Case 1: small demo shape (batch=2, channels=4, spatial=16), planes = 2*C
    # (standard downsampling shortcut), so pad = 2 and C_out = 8.
    key = jax.random.PRNGKey(0)
    B, C, H, W = 2, 4, 16, 16
    planes = 2 * C
    x = jax.random.normal(key, (B, C, H, W), dtype=jnp.float32)
    out = jax.block_until_ready(lambda_layer(x, planes))
    padc = planes // 4
    ref = jnp.pad(x[:, :, ::2, ::2], ((0, 0), (padc, padc), (0, 0), (0, 0)))
    assert out.shape == ref.shape, (out.shape, ref.shape)
    assert jnp.allclose(out, ref, atol=1e-6, rtol=1e-6), "mismatch vs reference (case 1)"

    # Case 2: a real colornet shortcut shape (16 -> 32 channels, 32x32 -> 16x16):
    # sublane-aligned pad/data bands and a multi-step grid (megacore-friendly).
    B2, C2, H2, W2 = 8, 16, 32, 32
    planes2 = 2 * C2
    x2 = jax.random.normal(jax.random.PRNGKey(1), (B2, C2, H2, W2), dtype=jnp.float32)
    out2 = jax.block_until_ready(lambda_layer(x2, planes2))
    pad2 = planes2 // 4
    ref2 = jnp.pad(x2[:, :, ::2, ::2], ((0, 0), (pad2, pad2), (0, 0), (0, 0)))
    assert out2.shape == ref2.shape, (out2.shape, ref2.shape)
    assert jnp.allclose(out2, ref2, atol=1e-6, rtol=1e-6), "mismatch vs reference (case 2)"

    print("KERNEL_OK")
</pallas_src>

<mosaic_0001>
module attributes {stable_mosaic.version = 11 : i64} {
  func.func @_shortcut_kernel(%arg0: i32, %arg1: memref<8x256xf32, #tpu.memory_space<vmem>>, %arg2: memref<256x64xf32, #tpu.memory_space<vmem>>, %arg3: memref<2x8x64xf32, #tpu.memory_space<vmem>>) attributes {dimension_semantics = [#tpu.dimension_semantics<parallel>], iteration_bounds = array<i64: 1>, scalar_prefetch = 0 : i64, scratch_operands = 0 : i64, tpu.core_type = #tpu.core_type<tc>, window_params = [{transform_indices = @transform_0, window_bounds = array<i64: 8, 256>}, {pipeline_mode = #tpu.pipeline_mode<synchronous>, transform_indices = @transform_1, window_bounds = array<i64: 256, 64>}, {transform_indices = @transform_2, window_bounds = array<i64: 2, 8, 64>}]} {
    %c0 = arith.constant 0 : index
    %c0_0 = arith.constant 0 : index
    %0 = vector.load %arg1[%c0, %c0_0] : memref<8x256xf32, #tpu.memory_space<vmem>>, vector<8x256xf32>
    %c0_1 = arith.constant 0 : index
    %c0_2 = arith.constant 0 : index
    %1 = vector.load %arg2[%c0_1, %c0_2] : memref<256x64xf32, #tpu.memory_space<vmem>>, vector<256x64xf32>
    %cst = arith.constant dense<0.000000e+00> : vector<8x64xf32>
    %2 = tpu.matmul %0, %1, %cst {dimension_numbers = #tpu.dot_dimension_numbers<[1], [0], [0], [1], [0, 0, 1, 1], [], []>, precision = #tpu.contract_precision<fp32>} : vector<8x256xf32>, vector<256x64xf32>, vector<8x64xf32> -> vector<8x64xf32>
    %3 = vector.shape_cast %2 : vector<8x64xf32> to vector<2x4x64xf32>
    %cst_3 = arith.constant 0.000000e+00 : f32
    %4 = vector.broadcast %cst_3 : f32 to vector<2x2x64xf32>
    %c0_4 = arith.constant 0 : index
    %c0_5 = arith.constant 0 : index
    %c0_6 = arith.constant 0 : index
    %5 = vector.load %arg3[%c0_4, %c0_5, %c0_6] : memref<2x8x64xf32, #tpu.memory_space<vmem>>, vector<2x2x64xf32>
    tpu.vector_store %arg3[%c0_4, %c0_5, %c0_6], %4 {strides = array<i32>} : memref<2x8x64xf32, #tpu.memory_space<vmem>>, vector<2x2x64xf32>,
    %c0_7 = arith.constant 0 : index
    %c6 = arith.constant 6 : index
    %c0_8 = arith.constant 0 : index
    %6 = vector.load %arg3[%c0_7, %c6, %c0_8] : memref<2x8x64xf32, #tpu.memory_space<vmem>>, vector<2x2x64xf32>
    tpu.vector_store %arg3[%c0_7, %c6, %c0_8], %4 {strides = array<i32>} : memref<2x8x64xf32, #tpu.memory_space<vmem>>, vector<2x2x64xf32>,
    %c0_9 = arith.constant 0 : index
    %c2 = arith.constant 2 : index
    %c0_10 = arith.constant 0 : index
    %7 = vector.load %arg3[%c0_9, %c2, %c0_10] : memref<2x8x64xf32, #tpu.memory_space<vmem>>, vector<2x4x64xf32>
    tpu.vector_store %arg3[%c0_9, %c2, %c0_10], %3 {strides = array<i32>} : memref<2x8x64xf32, #tpu.memory_space<vmem>>, vector<2x4x64xf32>,
    return
  }
  func.func @transform_0(%arg0: i32) -> (i32, i32) {
    %c0_i32 = arith.constant 0 : i32
    %c0_i32_0 = arith.constant 0 : i32
    return %arg0, %c0_i32 : i32, i32
  }
  func.func @transform_1(%arg0: i32) -> (i32, i32) {
    %c0_i32 = arith.constant 0 : i32
    %c0_i32_0 = arith.constant 0 : i32
    %c0_i32_1 = arith.constant 0 : i32
    return %c0_i32, %c0_i32_0 : i32, i32
  }
  func.func @transform_2(%arg0: i32) -> (i32, i32, i32) {
    %c0_i32 = arith.constant 0 : i32
    %c0_i32_0 = arith.constant 0 : i32
    %c0_i32_1 = arith.constant 0 : i32
    return %arg0, %c0_i32, %c0_i32_0 : i32, i32, i32
  }
}

</mosaic_0001>

<llo_original>
// kernel: tpu_custom_call.1
$region0: #{tpu_custom_call.1}
  #allocation0 [shape = 'u32[]', space=smem, size = 0x4, offset = 0x4, fixed_abs, tag = 'smem constant byte address 0x4 - core index']
  #allocation1 [shape = 'u32[72,128]{1,0:T(1,128)}', space=vmem, size = 0x9000, scoped, tag = 'internal scratch']
  %s0 = inlined_call_operand.vmem [shape: f32[8,256], index: 0, kind: input, shape index: {}]
  %s1 = inlined_call_operand.vmem [shape: f32[256,64], index: 1, kind: input, shape index: {}]
  %s2 = inlined_call_operand.hbm [shape: f32[2,8,64], index: 2, kind: output, shape index: {}]
  %s3 = sld [smem:[#allocation0]]
  $region18: #{tpu_custom_call.1} parent=0
    _
  %s5 = ssub.s32 1, %s3
  %s6 = scalar_select 0, %s5, %s3
  $region1: #{tpu_custom_call.1} parent=0
    #allocation2 [shape = 'u8[8192]{0}', space=vmem, size = 0x2000, scoped, tag = 'output window, operand 0, single buffered']
    #allocation3 [shape = 's32[1]{0}', space=sflag, size = 0x4, scoped, tag = 'scoped memory for tpu_custom_call.1']
    %7 = vsyncpa [#allocation3], 0
    // Predicated region
    $region2: #{tpu_custom_call.1} parent=1 // pred_check
      _
    $region3: #{tpu_custom_call.1} parent=1 // pred_check_branch
      %9 = sbr.rel (0) target = $region5
    $region4: #{tpu_custom_call.1} parent=1 // pred_region
      _
    $region5: #{tpu_custom_call.1} parent=1 // pred_fallthru
      _
    // Predicated region
    $region6: #{tpu_custom_call.1} parent=1 // pred_check
      _
    $region7: #{tpu_custom_call.1} parent=1 // pred_check_branch
      %11 = sbr.rel (0) target = $region9
    $region8: #{tpu_custom_call.1} parent=1 // pred_region
      _
    $region9: #{tpu_custom_call.1} parent=1 // pred_fallthru
      _
    %v12 = vld [vmem:[%s0] sm:$0xff]
    %v13 = vld [vmem:[%s0 + $0x8] sm:$0xff]
    %v14 = vld [vmem:[%s1] sm:$0xff]
    %v15 = vld [vmem:[%s1 + $0x8] sm:$0xff]
    %v16 = vld [vmem:[%s1 + $0x10] sm:$0xff]
    %v17 = vld [vmem:[%s1 + $0x18] sm:$0xff]
    %v18 = vld [vmem:[%s1 + $0x20] sm:$0xff]
    %v19 = vld [vmem:[%s1 + $0x28] sm:$0xff]
    %v20 = vld [vmem:[%s1 + $0x30] sm:$0xff]
    %v21 = vld [vmem:[%s1 + $0x38] sm:$0xff]
    %v22 = vld [vmem:[%s1 + $0x40] sm:$0xff]
    %v23 = vld [vmem:[%s1 + $0x48] sm:$0xff]
    %v24 = vld [vmem:[%s1 + $0x50] sm:$0xff]
    %v25 = vld [vmem:[%s1 + $0x58] sm:$0xff]
    %v26 = vld [vmem:[%s1 + $0x60] sm:$0xff]
    %v27 = vld [vmem:[%s1 + $0x68] sm:$0xff]
    %v28 = vld [vmem:[%s1 + $0x70] sm:$0xff]
    %v29 = vld [vmem:[%s1 + $0x78] sm:$0xff]
    %v30 = vld [vmem:[%s1 + $0x80] sm:$0xff]
    %v31 = vld [vmem:[%s1 + $0x88] sm:$0xff]
    %v32 = vld [vmem:[%s1 + $0x90] sm:$0xff]
    %v33 = vld [vmem:[%s1 + $0x98] sm:$0xff]
    %v34 = vld [vmem:[%s1 + $0xa0] sm:$0xff]
    %v35 = vld [vmem:[%s1 + $0xa8] sm:$0xff]
    %v36 = vld [vmem:[%s1 + $0xb0] sm:$0xff]
    %v37 = vld [vmem:[%s1 + $0xb8] sm:$0xff]
    %v38 = vld [vmem:[%s1 + $0xc0] sm:$0xff]
    %v39 = vld [vmem:[%s1 + $0xc8] sm:$0xff]
    %v40 = vld [vmem:[%s1 + $0xd0] sm:$0xff]
    %v41 = vld [vmem:[%s1 + $0xd8] sm:$0xff]
    %v42 = vld [vmem:[%s1 + $0xe0] sm:$0xff]
    %v43 = vld [vmem:[%s1 + $0xe8] sm:$0xff]
    %v44 = vld [vmem:[%s1 + $0xf0] sm:$0xff]
    %v45 = vld [vmem:[%s1 + $0xf8] sm:$0xff]
    %v46 = vand.u32 %v29, 4294901760
    %47 = vmatpush.msra.mxu0 %v46
    %v48 = vand.u32 %v28, 4294901760
    %49 = vmatpush.msra.mxu0 %v48
    %v50 = vand.u32 %v27, 4294901760
    %51 = vmatpush.msra.mxu0 %v50
    %v52 = vand.u32 %v26, 4294901760
    %53 = vmatpush.msra.mxu0 %v52
    %v54 = vand.u32 %v25, 4294901760
    %55 = vmatpush.msra.mxu0 %v54
    %v56 = vand.u32 %v24, 4294901760
    %57 = vmatpush.msra.mxu0 %v56
    %v58 = vand.u32 %v23, 4294901760
    %59 = vmatpush.msra.mxu0 %v58
    %v60 = vand.u32 %v22, 4294901760
    %61 = vmatpush.msra.mxu0 %v60
    %v62 = vand.u32 %v21, 4294901760
    %63 = vmatpush.msra.mxu0 %v62
    %v64 = vand.u32 %v20, 4294901760
    %65 = vmatpush.msra.mxu0 %v64
    %v66 = vand.u32 %v19, 4294901760
    %67 = vmatpush.msra.mxu0 %v66
    %v68 = vand.u32 %v18, 4294901760
    %69 = vmatpush.msra.mxu0 %v68
    %v70 = vand.u32 %v17, 4294901760
    %71 = vmatpush.msra.mxu0 %v70
    %v72 = vand.u32 %v16, 4294901760
    %73 = vmatpush.msra.mxu0 %v72
    %v74 = vand.u32 %v15, 4294901760
    %75 = vmatpush.msra.mxu0 %v74
    %v76 = vand.u32 %v14, 4294901760
    %77 = vmatpush.msra.mxu0 %v76
    %v78 = vand.u32 %v12, 4294901760
    %v79 = vsub.f32 %v12, %v78
    %v80 = vand.u32 %v79, 4294901760
    %v81 = vsub.f32 %v79, %v80
    %v82 = vand.u32 %v81, 4294901760
    %83 = vmatmul.f32.gmra.mxu0 %v82
    %v84 = vpop.f32.mrf.mxu0
    %v85 = vadd.f32 0.0, %v84
    %86 = vdwg.mxu0
    %v87 = vand.u32 %v29, 4294901760
    %v88 = vsub.f32 %v29, %v87
    %v89 = vand.u32 %v88, 4294901760
    %v90 = vsub.f32 %v88, %v89
    %v91 = vand.u32 %v90, 4294901760
    %92 = vmatpush.msra.mxu0 %v91
    %v93 = vand.u32 %v28, 4294901760
    %v94 = vsub.f32 %v28, %v93
    %v95 = vand.u32 %v94, 4294901760
    %v96 = vsub.f32 %v94, %v95
    %v97 = vand.u32 %v96, 4294901760
    %98 = vmatpush.msra.mxu0 %v97
    %v99 = vand.u32 %v27, 4294901760
    %v100 = vsub.f32 %v27, %v99
    %v101 = vand.u32 %v100, 4294901760
    %v102 = vsub.f32 %v100, %v101
    %v103 = vand.u32 %v102, 4294901760
    %104 = vmatpush.msra.mxu0 %v103
    %v105 = vand.u32 %v26, 4294901760
    %v106 = vsub.f32 %v26, %v105
    %v107 = vand.u32 %v106, 4294901760
    %v108 = vsub.f32 %v106, %v107
    %v109 = vand.u32 %v108, 4294901760
    %110 = vmatpush.msra.mxu0 %v109
    %v111 = vand.u32 %v25, 4294901760
    %v112 = vsub.f32 %v25, %v111
    %v113 = vand.u32 %v112, 4294901760
    %v114 = vsub.f32 %v112, %v113
    %v115 = vand.u32 %v114, 4294901760
    %116 = vmatpush.msra.mxu0 %v115
    %v117 = vand.u32 %v24, 4294901760
    %v118 = vsub.f32 %v24, %v117
    %v119 = vand.u32 %v118, 4294901760
    %v120 = vsub.f32 %v118, %v119
    %v121 = vand.u32 %v120, 4294901760
    %122 = vmatpush.msra.mxu0 %v121
    %v123 = vand.u32 %v23, 4294901760
    %v124 = vsub.f32 %v23, %v123
    %v125 = vand.u32 %v124, 4294901760
    %v126 = vsub.f32 %v124, %v125
    %v127 = vand.u32 %v126, 4294901760
    %128 = vmatpush.msra.mxu0 %v127
    %v129 = vand.u32 %v22, 4294901760
    %v130 = vsub.f32 %v22, %v129
    %v131 = vand.u32 %v130, 4294901760
    %v132 = vsub.f32 %v130, %v131
    %v133 = vand.u32 %v132, 4294901760
    %134 = vmatpush.msra.mxu0 %v133
    %v135 = vand.u32 %v21, 4294901760
    %v136 = vsub.f32 %v21, %v135
    %v137 = vand.u32 %v136, 4294901760
    %v138 = vsub.f32 %v136, %v137
    %v139 = vand.u32 %v138, 4294901760
    %140 = vmatpush.msra.mxu0 %v139
    %v141 = vand.u32 %v20, 4294901760
    %v142 = vsub.f32 %v20, %v141
    %v143 = vand.u32 %v142, 4294901760
    %v144 = vsub.f32 %v142, %v143
    %v145 = vand.u32 %v144, 4294901760
    %146 = vmatpush.msra.mxu0 %v145
    %v147 = vand.u32 %v19, 4294901760
    %v148 = vsub.f32 %v19, %v147
    %v149 = vand.u32 %v148, 4294901760
    %v150 = vsub.f32 %v148, %v149
    %v151 = vand.u32 %v150, 4294901760
    %152 = vmatpush.msra.mxu0 %v151
    %v153 = vand.u32 %v18, 4294901760
    %v154 = vsub.f32 %v18, %v153
    %v155 = vand.u32 %v154, 4294901760
    %v156 = vsub.f32 %v154, %v155
    %v157 = vand.u32 %v156, 4294901760
    %158 = vmatpush.msra.mxu0 %v157
    %v159 = vand.u32 %v17, 4294901760
    %v160 = vsub.f32 %v17, %v159
    %v161 = vand.u32 %v160, 4294901760
    %v162 = vsub.f32 %v160, %v161
    %v163 = vand.u32 %v162, 4294901760
    %164 = vmatpush.msra.mxu0 %v163
    %v165 = vand.u32 %v16, 4294901760
    %v166 = vsub.f32 %v16, %v165
    %v167 = vand.u32 %v166, 4294901760
    %v168 = vsub.f32 %v166, %v167
    %v169 = vand.u32 %v168, 4294901760
    %170 = vmatpush.msra.mxu0 %v169
    %v171 = vand.u32 %v15, 4294901760
    %v172 = vsub.f32 %v15, %v171
    %v173 = vand.u32 %v172, 4294901760
    %v174 = vsub.f32 %v172, %v173
    %v175 = vand.u32 %v174, 4294901760
    %176 = vmatpush.msra.mxu0 %v175
    %v177 = vand.u32 %v14, 4294901760
    %v178 = vsub.f32 %v14, %v177
    %v179 = vand.u32 %v178, 4294901760
    %v180 = vsub.f32 %v178, %v179
    %v181 = vand.u32 %v180, 4294901760
    %182 = vmatpush.msra.mxu0 %v181
    %v183 = vand.u32 %v12, 4294901760
    %184 = vmatmul.f32.gmra.mxu0 %v183
    %v185 = vpop.f32.mrf.mxu0
    %v186 = vadd.f32 %v85, %v185
    %187 = vdwg.mxu0
    %v188 = vand.u32 %v29, 4294901760
    %v189 = vsub.f32 %v29, %v188
    %190 = vmatpush.msra.mxu0 %v189
    %v191 = vand.u32 %v28, 4294901760
    %v192 = vsub.f32 %v28, %v191
    %193 = vmatpush.msra.mxu0 %v192
    %v194 = vand.u32 %v27, 4294901760
    %v195 = vsub.f32 %v27, %v194
    %196 = vmatpush.msra.mxu0 %v195
    %v197 = vand.u32 %v26, 4294901760
    %v198 = vsub.f32 %v26, %v197
    %199 = vmatpush.msra.mxu0 %v198
    %v200 = vand.u32 %v25, 4294901760
    %v201 = vsub.f32 %v25, %v200
    %202 = vmatpush.msra.mxu0 %v201
    %v203 = vand.u32 %v24, 4294901760
    %v204 = vsub.f32 %v24, %v203
    %205 = vmatpush.msra.mxu0 %v204
    %v206 = vand.u32 %v23, 4294901760
    %v207 = vsub.f32 %v23, %v206
    %208 = vmatpush.msra.mxu0 %v207
    %v209 = vand.u32 %v22, 4294901760
    %v210 = vsub.f32 %v22, %v209
    %211 = vmatpush.msra.mxu0 %v210
    %v212 = vand.u32 %v21, 4294901760
    %v213 = vsub.f32 %v21, %v212
    %214 = vmatpush.msra.mxu0 %v213
    %v215 = vand.u32 %v20, 4294901760
    %v216 = vsub.f32 %v20, %v215
    %217 = vmatpush.msra.mxu0 %v216
    %v218 = vand.u32 %v19, 4294901760
    %v219 = vsub.f32 %v19, %v218
    %220 = vmatpush.msra.mxu0 %v219
    %v221 = vand.u32 %v18, 4294901760
    %v222 = vsub.f32 %v18, %v221
    %223 = vmatpush.msra.mxu0 %v222
    %v224 = vand.u32 %v17, 4294901760
    %v225 = vsub.f32 %v17, %v224
    %226 = vmatpush.msra.mxu0 %v225
    %v227 = vand.u32 %v16, 4294901760
    %v228 = vsub.f32 %v16, %v227
    %229 = vmatpush.msra.mxu0 %v228
    %v230 = vand.u32 %v15, 4294901760
    %v231 = vsub.f32 %v15, %v230
    %232 = vmatpush.msra.mxu0 %v231
    %v233 = vand.u32 %v14, 4294901760
    %v234 = vsub.f32 %v14, %v233
    %235 = vmatpush.msra.mxu0 %v234
    %v236 = vand.u32 %v12, 4294901760
    %v237 = vsub.f32 %v12, %v236
    %238 = vmatmul.f32.gmra.mxu0 %v237
    %v239 = vpop.f32.mrf.mxu0
    %v240 = vadd.f32 %v186, %v239
    %241 = vdwg.mxu0
    %v242 = vand.u32 %v29, 4294901760
    %243 = vmatpush.msra.mxu0 %v242
    %v244 = vand.u32 %v28, 4294901760
    %245 = vmatpush.msra.mxu0 %v244
    %v246 = vand.u32 %v27, 4294901760
    %247 = vmatpush.msra.mxu0 %v246
    %v248 = vand.u32 %v26, 4294901760
    %249 = vmatpush.msra.mxu0 %v248
    %v250 = vand.u32 %v25, 4294901760
    %251 = vmatpush.msra.mxu0 %v250
    %v252 = vand.u32 %v24, 4294901760
    %253 = vmatpush.msra.mxu0 %v252
    %v254 = vand.u32 %v23, 4294901760
    %255 = vmatpush.msra.mxu0 %v254
    %v256 = vand.u32 %v22, 4294901760
    %257 = vmatpush.msra.mxu0 %v256
    %v258 = vand.u32 %v21, 4294901760
    %259 = vmatpush.msra.mxu0 %v258
    %v260 = vand.u32 %v20, 4294901760
    %261 = vmatpush.msra.mxu0 %v260
    %v262 = vand.u32 %v19, 4294901760
    %263 = vmatpush.msra.mxu0 %v262
    %v264 = vand.u32 %v18, 4294901760
    %265 = vmatpush.msra.mxu0 %v264
    %v266 = vand.u32 %v17, 4294901760
    %267 = vmatpush.msra.mxu0 %v266
    %v268 = vand.u32 %v16, 4294901760
    %269 = vmatpush.msra.mxu0 %v268
    %v270 = vand.u32 %v15, 4294901760
    %271 = vmatpush.msra.mxu0 %v270
    %v272 = vand.u32 %v14, 4294901760
    %273 = vmatpush.msra.mxu0 %v272
    %v274 = vand.u32 %v12, 4294901760
    %v275 = vsub.f32 %v12, %v274
    %v276 = vand.u32 %v275, 4294901760
    %277 = vmatmul.f32.gmra.mxu0 %v276
    %v278 = vpop.f32.mrf.mxu0
    %v279 = vadd.f32 %v240, %v278
    %280 = vdwg.mxu0
    %v281 = vand.u32 %v29, 4294901760
    %v282 = vsub.f32 %v29, %v281
    %v283 = vand.u32 %v282, 4294901760
    %284 = vmatpush.msra.mxu0 %v283
    %v285 = vand.u32 %v28, 4294901760
    %v286 = vsub.f32 %v28, %v285
    %v287 = vand.u32 %v286, 4294901760
    %288 = vmatpush.msra.mxu0 %v287
    %v289 = vand.u32 %v27, 4294901760
    %v290 = vsub.f32 %v27, %v289
    %v291 = vand.u32 %v290, 4294901760
    %292 = vmatpush.msra.mxu0 %v291
    %v293 = vand.u32 %v26, 4294901760
    %v294 = vsub.f32 %v26, %v293
    %v295 = vand.u32 %v294, 4294901760
    %296 = vmatpush.msra.mxu0 %v295
    %v297 = vand.u32 %v25, 4294901760
    %v298 = vsub.f32 %v25, %v297
    %v299 = vand.u32 %v298, 4294901760
    %300 = vmatpush.msra.mxu0 %v299
    %v301 = vand.u32 %v24, 4294901760
    %v302 = vsub.f32 %v24, %v301
    %v303 = vand.u32 %v302, 4294901760
    %304 = vmatpush.msra.mxu0 %v303
    %v305 = vand.u32 %v23, 4294901760
    %v306 = vsub.f32 %v23, %v305
    %v307 = vand.u32 %v306, 4294901760
    %308 = vmatpush.msra.mxu0 %v307
    %v309 = vand.u32 %v22, 4294901760
    %v310 = vsub.f32 %v22, %v309
    %v311 = vand.u32 %v310, 4294901760
    %312 = vmatpush.msra.mxu0 %v311
    %v313 = vand.u32 %v21, 4294901760
    %v314 = vsub.f32 %v21, %v313
    %v315 = vand.u32 %v314, 4294901760
    %316 = vmatpush.msra.mxu0 %v315
    %v317 = vand.u32 %v20, 4294901760
    %v318 = vsub.f32 %v20, %v317
    %v319 = vand.u32 %v318, 4294901760
    %320 = vmatpush.msra.mxu0 %v319
    %v321 = vand.u32 %v19, 4294901760
    %v322 = vsub.f32 %v19, %v321
    %v323 = vand.u32 %v322, 4294901760
    %324 = vmatpush.msra.mxu0 %v323
    %v325 = vand.u32 %v18, 4294901760
    %v326 = vsub.f32 %v18, %v325
    %v327 = vand.u32 %v326, 4294901760
    %328 = vmatpush.msra.mxu0 %v327
    %v329 = vand.u32 %v17, 4294901760
    %v330 = vsub.f32 %v17, %v329
    %v331 = vand.u32 %v330, 4294901760
    %332 = vmatpush.msra.mxu0 %v331
    %v333 = vand.u32 %v16, 4294901760
    %v334 = vsub.f32 %v16, %v333
    %v335 = vand.u32 %v334, 4294901760
    %336 = vmatpush.msra.mxu0 %v335
    %v337 = vand.u32 %v15, 4294901760
    %v338 = vsub.f32 %v15, %v337
    %v339 = vand.u32 %v338, 4294901760
    %340 = vmatpush.msra.mxu0 %v339
    %v341 = vand.u32 %v14, 4294901760
    %v342 = vsub.f32 %v14, %v341
    %v343 = vand.u32 %v342, 4294901760
    %344 = vmatpush.msra.mxu0 %v343
    %v345 = vand.u32 %v12, 4294901760
    %346 = vmatmul.f32.gmra.mxu0 %v345
    %v347 = vpop.f32.mrf.mxu0
    %v348 = vadd.f32 %v279, %v347
    %349 = vdwg.mxu0
    %v350 = vand.u32 %v29, 4294901760
    %351 = vmatpush.msra.mxu0 %v350
    %v352 = vand.u32 %v28, 4294901760
    %353 = vmatpush.msra.mxu0 %v352
    %v354 = vand.u32 %v27, 4294901760
    %355 = vmatpush.msra.mxu0 %v354
    %v356 = vand.u32 %v26, 4294901760
    %357 = vmatpush.msra.mxu0 %v356
    %v358 = vand.u32 %v25, 4294901760
    %359 = vmatpush.msra.mxu0 %v358
    %v360 = vand.u32 %v24, 4294901760
    %361 = vmatpush.msra.mxu0 %v360
    %v362 = vand.u32 %v23, 4294901760
    %363 = vmatpush.msra.mxu0 %v362
    %v364 = vand.u32 %v22, 4294901760
    %365 = vmatpush.msra.mxu0 %v364
    %v366 = vand.u32 %v21, 4294901760
    %367 = vmatpush.msra.mxu0 %v366
    %v368 = vand.u32 %v20, 4294901760
    %369 = vmatpush.msra.mxu0 %v368
    %v370 = vand.u32 %v19, 4294901760
    %371 = vmatpush.msra.mxu0 %v370
    %v372 = vand.u32 %v18, 4294901760
    %373 = vmatpush.msra.mxu0 %v372
    %v374 = vand.u32 %v17, 4294901760
    %375 = vmatpush.msra.mxu0 %v374
    %v376 = vand.u32 %v16, 4294901760
    %377 = vmatpush.msra.mxu0 %v376
    %v378 = vand.u32 %v15, 4294901760
    %379 = vmatpush.msra.mxu0 %v378
    %v380 = vand.u32 %v14, 4294901760
    %381 = vmatpush.msra.mxu0 %v380
    %v382 = vand.u32 %v12, 4294901760
    %383 = vmatmul.f32.gmra.mxu0 %v382
    %v384 = vpop.f32.mrf.mxu0
    %v385 = vadd.f32 %v348, %v384
    %386 = vdwg.mxu0
    %v387 = vand.u32 %v45, 4294901760
    %388 = vmatpush.msra.mxu0 %v387
    %v389 = vand.u32 %v44, 4294901760
    %390 = vmatpush.msra.mxu0 %v389
    %v391 = vand.u32 %v43, 4294901760
    %392 = vmatpush.msra.mxu0 %v391
    %v393 = vand.u32 %v42, 4294901760
    %394 = vmatpush.msra.mxu0 %v393
    %v395 = vand.u32 %v41, 4294901760
    %396 = vmatpush.msra.mxu0 %v395
    %v397 = vand.u32 %v40, 4294901760
    %398 = vmatpush.msra.mxu0 %v397
    %v399 = vand.u32 %v39, 4294901760
    %400 = vmatpush.msra.mxu0 %v399
    %v401 = vand.u32 %v38, 4294901760
    %402 = vmatpush.msra.mxu0 %v401
    %v403 = vand.u32 %v37, 4294901760
    %404 = vmatpush.msra.mxu0 %v403
    %v405 = vand.u32 %v36, 4294901760
    %406 = vmatpush.msra.mxu0 %v405
    %v407 = vand.u32 %v35, 4294901760
    %408 = vmatpush.msra.mxu0 %v407
    %v409 = vand.u32 %v34, 4294901760
    %410 = vmatpush.msra.mxu0 %v409
    %v411 = vand.u32 %v33, 4294901760
    %412 = vmatpush.msra.mxu0 %v411
    %v413 = vand.u32 %v32, 4294901760
    %414 = vmatpush.msra.mxu0 %v413
    %v415 = vand.u32 %v31, 4294901760
    %416 = vmatpush.msra.mxu0 %v415
    %v417 = vand.u32 %v30, 4294901760
    %418 = vmatpush.msra.mxu0 %v417
    %v419 = vand.u32 %v13, 4294901760
    %v420 = vsub.f32 %v13, %v419
    %v421 = vand.u32 %v420, 4294901760
    %v422 = vsub.f32 %v420, %v421
    %v423 = vand.u32 %v422, 4294901760
    %424 = vmatmul.f32.gmra.mxu0 %v423
    %v425 = vpop.f32.mrf.mxu0
    %v426 = vadd.f32 %v385, %v425
    %427 = vdwg.mxu0
    %v428 = vand.u32 %v45, 4294901760
    %v429 = vsub.f32 %v45, %v428
    %v430 = vand.u32 %v429, 4294901760
    %v431 = vsub.f32 %v429, %v430
    %v432 = vand.u32 %v431, 4294901760
    %433 = vmatpush.msra.mxu0 %v432
    %v434 = vand.u32 %v44, 4294901760
    %v435 = vsub.f32 %v44, %v434
    %v436 = vand.u32 %v435, 4294901760
    %v437 = vsub.f32 %v435, %v436
    %v438 = vand.u32 %v437, 4294901760
    %439 = vmatpush.msra.mxu0 %v438
    %v440 = vand.u32 %v43, 4294901760
    %v441 = vsub.f32 %v43, %v440
    %v442 = vand.u32 %v441, 4294901760
    %v443 = vsub.f32 %v441, %v442
    %v444 = vand.u32 %v443, 4294901760
    %445 = vmatpush.msra.mxu0 %v444
    %v446 = vand.u32 %v42, 4294901760
    %v447 = vsub.f32 %v42, %v446
    %v448 = vand.u32 %v447, 4294901760
    %v449 = vsub.f32 %v447, %v448
    %v450 = vand.u32 %v449, 4294901760
    %451 = vmatpush.msra.mxu0 %v450
    %v452 = vand.u32 %v41, 4294901760
    %v453 = vsub.f32 %v41, %v452
    %v454 = vand.u32 %v453, 4294901760
    %v455 = vsub.f32 %v453, %v454
    %v456 = vand.u32 %v455, 4294901760
    %457 = vmatpush.msra.mxu0 %v456
    %v458 = vand.u32 %v40, 4294901760
    %v459 = vsub.f32 %v40, %v458
    %v460 = vand.u32 %v459, 4294901760
    %v461 = vsub.f32 %v459, %v460
    %v462 = vand.u32 %v461, 4294901760
    %463 = vmatpush.msra.mxu0 %v462
    %v464 = vand.u32 %v39, 4294901760
    %v465 = vsub.f32 %v39, %v464
    %v466 = vand.u32 %v465, 4294901760
    %v467 = vsub.f32 %v465, %v466
    %v468 = vand.u32 %v467, 4294901760
    %469 = vmatpush.msra.mxu0 %v468
    %v470 = vand.u32 %v38, 4294901760
    %v471 = vsub.f32 %v38, %v470
    %v472 = vand.u32 %v471, 4294901760
    %v473 = vsub.f32 %v471, %v472
    %v474 = vand.u32 %v473, 4294901760
    %475 = vmatpush.msra.mxu0 %v474
    %v476 = vand.u32 %v37, 4294901760
    %v477 = vsub.f32 %v37, %v476
    %v478 = vand.u32 %v477, 4294901760
    %v479 = vsub.f32 %v477, %v478
    %v480 = vand.u32 %v479, 4294901760
    %481 = vmatpush.msra.mxu0 %v480
    %v482 = vand.u32 %v36, 4294901760
    %v483 = vsub.f32 %v36, %v482
    %v484 = vand.u32 %v483, 4294901760
    %v485 = vsub.f32 %v483, %v484
    %v486 = vand.u32 %v485, 4294901760
    %487 = vmatpush.msra.mxu0 %v486
    %v488 = vand.u32 %v35, 4294901760
    %v489 = vsub.f32 %v35, %v488
    %v490 = vand.u32 %v489, 4294901760
    %v491 = vsub.f32 %v489, %v490
    %v492 = vand.u32 %v491, 4294901760
    %493 = vmatpush.msra.mxu0 %v492
    %v494 = vand.u32 %v34, 4294901760
    %v495 = vsub.f32 %v34, %v494
    %v496 = vand.u32 %v495, 4294901760
    %v497 = vsub.f32 %v495, %v496
    %v498 = vand.u32 %v497, 4294901760
    %499 = vmatpush.msra.mxu0 %v498
    %v500 = vand.u32 %v33, 4294901760
    %v501 = vsub.f32 %v33, %v500
    %v502 = vand.u32 %v501, 4294901760
    %v503 = vsub.f32 %v501, %v502
    %v504 = vand.u32 %v503, 4294901760
    %505 = vmatpush.msra.mxu0 %v504
    %v506 = vand.u32 %v32, 4294901760
    %v507 = vsub.f32 %v32, %v506
    %v508 = vand.u32 %v507, 4294901760
    %v509 = vsub.f32 %v507, %v508
    %v510 = vand.u32 %v509, 4294901760
    %511 = vmatpush.msra.mxu0 %v510
    %v512 = vand.u32 %v31, 4294901760
    %v513 = vsub.f32 %v31, %v512
    %v514 = vand.u32 %v513, 4294901760
    %v515 = vsub.f32 %v513, %v514
    %v516 = vand.u32 %v515, 4294901760
    %517 = vmatpush.msra.mxu0 %v516
    %v518 = vand.u32 %v30, 4294901760
    %v519 = vsub.f32 %v30, %v518
    %v520 = vand.u32 %v519, 4294901760
    %v521 = vsub.f32 %v519, %v520
    %v522 = vand.u32 %v521, 4294901760
    %523 = vmatpush.msra.mxu0 %v522
    %v524 = vand.u32 %v13, 4294901760
    %525 = vmatmul.f32.gmra.mxu0 %v524
    %v526 = vpop.f32.mrf.mxu0
    %v527 = vadd.f32 %v426, %v526
    %528 = vdwg.mxu0
    %v529 = vand.u32 %v45, 4294901760
    %v530 = vsub.f32 %v45, %v529
    %531 = vmatpush.msra.mxu0 %v530
    %v532 = vand.u32 %v44, 4294901760
    %v533 = vsub.f32 %v44, %v532
    %534 = vmatpush.msra.mxu0 %v533
    %v535 = vand.u32 %v43, 4294901760
    %v536 = vsub.f32 %v43, %v535
    %537 = vmatpush.msra.mxu0 %v536
    %v538 = vand.u32 %v42, 4294901760
    %v539 = vsub.f32 %v42, %v538
    %540 = vmatpush.msra.mxu0 %v539
    %v541 = vand.u32 %v41, 4294901760
    %v542 = vsub.f32 %v41, %v541
    %543 = vmatpush.msra.mxu0 %v542
    %v544 = vand.u32 %v40, 4294901760
    %v545 = vsub.f32 %v40, %v544
    %546 = vmatpush.msra.mxu0 %v545
    %v547 = vand.u32 %v39, 4294901760
    %v548 = vsub.f32 %v39, %v547
    %549 = vmatpush.msra.mxu0 %v548
    %v550 = vand.u32 %v38, 4294901760
    %v551 = vsub.f32 %v38, %v550
    %552 = vmatpush.msra.mxu0 %v551
    %v553 = vand.u32 %v37, 4294901760
    %v554 = vsub.f32 %v37, %v553
    %555 = vmatpush.msra.mxu0 %v554
    %v556 = vand.u32 %v36, 4294901760
    %v557 = vsub.f32 %v36, %v556
    %558 = vmatpush.msra.mxu0 %v557
    %v559 = vand.u32 %v35, 4294901760
    %v560 = vsub.f32 %v35, %v559
    %561 = vmatpush.msra.mxu0 %v560
    %v562 = vand.u32 %v34, 4294901760
    %v563 = vsub.f32 %v34, %v562
    %564 = vmatpush.msra.mxu0 %v563
    %v565 = vand.u32 %v33, 4294901760
    %v566 = vsub.f32 %v33, %v565
    %567 = vmatpush.msra.mxu0 %v566
    %v568 = vand.u32 %v32, 4294901760
    %v569 = vsub.f32 %v32, %v568
    %570 = vmatpush.msra.mxu0 %v569
    %v571 = vand.u32 %v31, 4294901760
    %v572 = vsub.f32 %v31, %v571
    %573 = vmatpush.msra.mxu0 %v572
    %v574 = vand.u32 %v30, 4294901760
    %v575 = vsub.f32 %v30, %v574
    %576 = vmatpush.msra.mxu0 %v575
    %v577 = vand.u32 %v13, 4294901760
    %v578 = vsub.f32 %v13, %v577
    %579 = vmatmul.f32.gmra.mxu0 %v578
    %v580 = vpop.f32.mrf.mxu0
    %v581 = vadd.f32 %v527, %v580
    %582 = vdwg.mxu0
    %v583 = vand.u32 %v45, 4294901760
    %584 = vmatpush.msra.mxu0 %v583
    %v585 = vand.u32 %v44, 4294901760
    %586 = vmatpush.msra.mxu0 %v585
    %v587 = vand.u32 %v43, 4294901760
    %588 = vmatpush.msra.mxu0 %v587
    %v589 = vand.u32 %v42, 4294901760
    %590 = vmatpush.msra.mxu0 %v589
    %v591 = vand.u32 %v41, 4294901760
    %592 = vmatpush.msra.mxu0 %v591
    %v593 = vand.u32 %v40, 4294901760
    %594 = vmatpush.msra.mxu0 %v593
    %v595 = vand.u32 %v39, 4294901760
    %596 = vmatpush.msra.mxu0 %v595
    %v597 = vand.u32 %v38, 4294901760
    %598 = vmatpush.msra.mxu0 %v597
    %v599 = vand.u32 %v37, 4294901760
    %600 = vmatpush.msra.mxu0 %v599
    %v601 = vand.u32 %v36, 4294901760
    %602 = vmatpush.msra.mxu0 %v601
    %v603 = vand.u32 %v35, 4294901760
    %604 = vmatpush.msra.mxu0 %v603
    %v605 = vand.u32 %v34, 4294901760
    %606 = vmatpush.msra.mxu0 %v605
    %v607 = vand.u32 %v33, 4294901760
    %608 = vmatpush.msra.mxu0 %v607
    %v609 = vand.u32 %v32, 4294901760
    %610 = vmatpush.msra.mxu0 %v609
    %v611 = vand.u32 %v31, 4294901760
    %612 = vmatpush.msra.mxu0 %v611
    %v613 = vand.u32 %v30, 4294901760
    %614 = vmatpush.msra.mxu0 %v613
    %v615 = vand.u32 %v13, 4294901760
    %v616 = vsub.f32 %v13, %v615
    %v617 = vand.u32 %v616, 4294901760
    %618 = vmatmul.f32.gmra.mxu0 %v617
    %v619 = vpop.f32.mrf.mxu0
    %v620 = vadd.f32 %v581, %v619
    %621 = vdwg.mxu0
    %v622 = vand.u32 %v45, 4294901760
    %v623 = vsub.f32 %v45, %v622
    %v624 = vand.u32 %v623, 4294901760
    %625 = vmatpush.msra.mxu0 %v624
    %v626 = vand.u32 %v44, 4294901760
    %v627 = vsub.f32 %v44, %v626
    %v628 = vand.u32 %v627, 4294901760
    %629 = vmatpush.msra.mxu0 %v628
    %v630 = vand.u32 %v43, 4294901760
    %v631 = vsub.f32 %v43, %v630
    %v632 = vand.u32 %v631, 4294901760
    %633 = vmatpush.msra.mxu0 %v632
    %v634 = vand.u32 %v42, 4294901760
    %v635 = vsub.f32 %v42, %v634
    %v636 = vand.u32 %v635, 4294901760
    %637 = vmatpush.msra.mxu0 %v636
    %v638 = vand.u32 %v41, 4294901760
    %v639 = vsub.f32 %v41, %v638
    %v640 = vand.u32 %v639, 4294901760
    %641 = vmatpush.msra.mxu0 %v640
    %v642 = vand.u32 %v40, 4294901760
    %v643 = vsub.f32 %v40, %v642
    %v644 = vand.u32 %v643, 4294901760
    %645 = vmatpush.msra.mxu0 %v644
    %v646 = vand.u32 %v39, 4294901760
    %v647 = vsub.f32 %v39, %v646
    %v648 = vand.u32 %v647, 4294901760
    %649 = vmatpush.msra.mxu0 %v648
    %v650 = vand.u32 %v38, 4294901760
    %v651 = vsub.f32 %v38, %v650
    %v652 = vand.u32 %v651, 4294901760
    %653 = vmatpush.msra.mxu0 %v652
    %v654 = vand.u32 %v37, 4294901760
    %v655 = vsub.f32 %v37, %v654
    %v656 = vand.u32 %v655, 4294901760
    %657 = vmatpush.msra.mxu0 %v656
    %v658 = vand.u32 %v36, 4294901760
    %v659 = vsub.f32 %v36, %v658
    %v660 = vand.u32 %v659, 4294901760
    %661 = vmatpush.msra.mxu0 %v660
    %v662 = vand.u32 %v35, 4294901760
    %v663 = vsub.f32 %v35, %v662
    %v664 = vand.u32 %v663, 4294901760
    %665 = vmatpush.msra.mxu0 %v664
    %v666 = vand.u32 %v34, 4294901760
    %v667 = vsub.f32 %v34, %v666
    %v668 = vand.u32 %v667, 4294901760
    %669 = vmatpush.msra.mxu0 %v668
    %v670 = vand.u32 %v33, 4294901760
    %v671 = vsub.f32 %v33, %v670
    %v672 = vand.u32 %v671, 4294901760
    %673 = vmatpush.msra.mxu0 %v672
    %v674 = vand.u32 %v32, 4294901760
    %v675 = vsub.f32 %v32, %v674
    %v676 = vand.u32 %v675, 4294901760
    %677 = vmatpush.msra.mxu0 %v676
    %v678 = vand.u32 %v31, 4294901760
    %v679 = vsub.f32 %v31, %v678
    %v680 = vand.u32 %v679, 4294901760
    %681 = vmatpush.msra.mxu0 %v680
    %v682 = vand.u32 %v30, 4294901760
    %v683 = vsub.f32 %v30, %v682
    %v684 = vand.u32 %v683, 4294901760
    %685 = vmatpush.msra.mxu0 %v684
    %v686 = vand.u32 %v13, 4294901760
    %687 = vmatmul.f32.gmra.mxu0 %v686
    %v688 = vpop.f32.mrf.mxu0
    %v689 = vadd.f32 %v620, %v688
    %690 = vdwg.mxu0
    %v691 = vand.u32 %v45, 4294901760
    %692 = vmatpush.msra.mxu0 %v691
    %v693 = vand.u32 %v44, 4294901760
    %694 = vmatpush.msra.mxu0 %v693
    %v695 = vand.u32 %v43, 4294901760
    %696 = vmatpush.msra.mxu0 %v695
    %v697 = vand.u32 %v42, 4294901760
    %698 = vmatpush.msra.mxu0 %v697
    %v699 = vand.u32 %v41, 4294901760
    %700 = vmatpush.msra.mxu0 %v699
    %v701 = vand.u32 %v40, 4294901760
    %702 = vmatpush.msra.mxu0 %v701
    %v703 = vand.u32 %v39, 4294901760
    %704 = vmatpush.msra.mxu0 %v703
    %v705 = vand.u32 %v38, 4294901760
    %706 = vmatpush.msra.mxu0 %v705
    %v707 = vand.u32 %v37, 4294901760
    %708 = vmatpush.msra.mxu0 %v707
    %v709 = vand.u32 %v36, 4294901760
    %710 = vmatpush.msra.mxu0 %v709
    %v711 = vand.u32 %v35, 4294901760
    %712 = vmatpush.msra.mxu0 %v711
    %v713 = vand.u32 %v34, 4294901760
    %714 = vmatpush.msra.mxu0 %v713
    %v715 = vand.u32 %v33, 4294901760
    %716 = vmatpush.msra.mxu0 %v715
    %v717 = vand.u32 %v32, 4294901760
    %718 = vmatpush.msra.mxu0 %v717
    %v719 = vand.u32 %v31, 4294901760
    %720 = vmatpush.msra.mxu0 %v719
    %v721 = vand.u32 %v30, 4294901760
    %722 = vmatpush.msra.mxu0 %v721
    %v723 = vand.u32 %v13, 4294901760
    %724 = vmatmul.f32.gmra.mxu0 %v723
    %v725 = vpop.f32.mrf.mxu0
    %v726 = vadd.f32 %v689, %v725
    %727 = vdwg.mxu0
    %v729 = vrot.slane %v726, 4
    %vm731 = vcmask 517120
    %732 = vst.msk [vmem:[#allocation2] sm:$0x3] %vm731, 0.0
    %733 = vst.msk [vmem:[#allocation2 + $0x8] sm:$0x3] %vm731, 0.0
    %734 = vst.msk [vmem:[#allocation2 + $0x6] sm:$0x3] %vm731, 0.0
    %735 = vst.msk [vmem:[#allocation2 + $0xe] sm:$0x3] %vm731, 0.0
    %vm736 = vcmask 519168
    %737 = vst.msk [vmem:[#allocation2 + $0x2] sm:$0xf] %vm736, %v726
    %738 = vst.msk [vmem:[#allocation2 + $0xa] sm:$0xf] %vm736, %v729
    // Predicated region
    $region10: #{tpu_custom_call.1} parent=1 // pred_check
      _
    $region11: #{tpu_custom_call.1} parent=1 // pred_check_branch
      %740 = sbr.rel (0) target = $region13
    $region12: #{tpu_custom_call.1} parent=1 // pred_region
      %742 = vsyncadd [#allocation3], 0
      %s743 = sshll.u32 [#allocation2], 4
      %s744 = int_to_ptr.vmem [resolvable:$true] %s743
      %s745 = sshll.u32 %s2, 4
      %s746 = int_to_ptr.hbm [resolvable:$true] %s745
      %751 = dma.vmem_to_hbm [thread:$0]  %s744, 256, %s746, [#allocation3], 128, 128, 8
    $region13: #{tpu_custom_call.1} parent=1 // pred_fallthru
      _
    // Predicated region
    $region14: #{tpu_custom_call.1} parent=1 // pred_check
      _
    $region15: #{tpu_custom_call.1} parent=1 // pred_check_branch
      %753 = sbr.rel (0) target = $region17
    $region16: #{tpu_custom_call.1} parent=1 // pred_region
      %755 = dma.done [#allocation3], 256
    $region17: #{tpu_custom_call.1} parent=1 // pred_fallthru
      _
    %756 = vsyncpa [#allocation3], 1

</llo_original>
